<compile_context>
chip_gen: v7x
topology: tpu7x:2x2x1
jax: 0.10.0
libtpu: 0.0.40
codegen_flags: <defaults>
</compile_context>

<pallas_src>
import functools

import jax
import jax.numpy as jnp
from jax import lax
from jax.experimental import pallas as pl
from jax.experimental.pallas import tpu as pltpu


def _round_up(n, m):
    return ((n + m - 1) // m) * m


# ----------------------------- kernels --------------------------------------


def _step_kernel(x_ref, h_ref, wm_ref, u_ref, o_ref):
    # Single step: h_prev @ (W*mask).T + x @ U.T, tanh on the EUP.
    acc = jnp.dot(h_ref[...], wm_ref[...], preferred_element_type=jnp.float32)
    acc = acc + jnp.dot(x_ref[...], u_ref[...], preferred_element_type=jnp.float32)
    o_ref[...] = jnp.tanh(acc).astype(o_ref.dtype)


def _inproj_kernel(x_ref, u_ref, o_ref):
    # One row-tile of the big input projection: (m_tile, I) @ (I, h_pad).
    o_ref[...] = jnp.dot(
        x_ref[...], u_ref[...], preferred_element_type=jnp.float32
    ).astype(o_ref.dtype)


def _seq_kernel(xp_ref, h0_ref, w_ref, o_ref, h_ref, *, t_blk):
    # Grid = (batch_shard [parallel], time_block [arbitrary]).
    # xp_ref : (t_blk, b_shard, h_pad)  precomputed x @ U.T (padded)
    # h0_ref : (b_shard, h_pad)         initial hidden state (padded)
    # w_ref  : (h_pad, h_pad)           masked recurrent weight, resident
    # o_ref  : (t_blk, b_shard, h_pad)  hidden states for this block
    # h_ref  : VMEM scratch carrying h across time blocks for this shard.
    @pl.when(pl.program_id(1) == 0)
    def _init():
        h_ref[...] = h0_ref[...]

    w = w_ref[...]  # load once per block

    def body(i, h):
        h_new = jnp.tanh(
            jnp.dot(h, w, preferred_element_type=jnp.float32) + xp_ref[i]
        )
        o_ref[i] = h_new.astype(o_ref.dtype)   # one lane-dense store per step
        return h_new                           # carry in vregs within the block

    h_ref[...] = lax.fori_loop(0, t_blk, body, h_ref[...], unroll=True)


# ----------------------------- jitted wrappers -------------------------------


@jax.jit
def _step(x, h_prev, wm_t, u_t):
    bsz, hid = h_prev.shape
    vmem = pltpu.MemorySpace.VMEM
    return pl.pallas_call(
        _step_kernel,
        out_shape=jax.ShapeDtypeStruct((bsz, hid), jnp.float32),
        in_specs=[pl.BlockSpec(memory_space=vmem)] * 4,
        out_specs=pl.BlockSpec(memory_space=vmem),
    )(x, h_prev, wm_t, u_t)


@functools.partial(jax.jit, static_argnames=("t_blk",))
def _forward_sequence(xs, h0, wm_t_pad, u_t_pad, *, t_blk=None):
    t_len, bsz, inp = xs.shape
    hid = h0.shape[1]
    h_pad = wm_t_pad.shape[0]

    # Time blocking: amortize per-grid-step overhead; keep blocks 8-aligned.
    if t_blk is None:
        t_blk = 128
    t_blk = max(8, _round_up(min(t_blk, _round_up(t_len, 8)), 8))
    t_pad = _round_up(t_len, t_blk)
    n_tblk = t_pad // t_blk

    # Batch shards -> "parallel" axis (engages v7x's second TensorCore).
    n_bshard = 2 if (bsz >= 16 and bsz % 16 == 0) else 1
    b_shard = bsz // n_bshard

    xs_p = xs if t_pad == t_len else jnp.pad(xs, ((0, t_pad - t_len), (0, 0), (0, 0)))
    h0_p = h0 if h_pad == hid else jnp.pad(h0, ((0, 0), (0, h_pad - hid)))

    # ---- (1) input projection for all timesteps as one big matmul ----------
    m = t_pad * bsz
    m_tile = t_blk * bsz           # divides m exactly, multiple of 8
    xs_flat = xs_p.reshape(m, inp)
    xp_flat = pl.pallas_call(
        _inproj_kernel,
        out_shape=jax.ShapeDtypeStruct((m, h_pad), jnp.float32),
        grid=(m // m_tile,),
        in_specs=[
            pl.BlockSpec((m_tile, inp), lambda i: (i, 0)),
            pl.BlockSpec((inp, h_pad), lambda i: (0, 0)),
        ],
        out_specs=pl.BlockSpec((m_tile, h_pad), lambda i: (i, 0)),
        compiler_params=pltpu.CompilerParams(dimension_semantics=("parallel",)),
    )(xs_flat, u_t_pad)
    xp = xp_flat.reshape(t_pad, bsz, h_pad)

    # ---- (2) blocked recurrence in one pallas_call --------------------------
    kernel = functools.partial(_seq_kernel, t_blk=t_blk)
    hs_pad = pl.pallas_call(
        kernel,
        out_shape=jax.ShapeDtypeStruct((t_pad, bsz, h_pad), jnp.float32),
        grid_spec=pltpu.PrefetchScalarGridSpec(
            num_scalar_prefetch=0,
            grid=(n_bshard, n_tblk),
            in_specs=[
                pl.BlockSpec((t_blk, b_shard, h_pad), lambda b, t: (t, b, 0)),  # xproj
                pl.BlockSpec((b_shard, h_pad), lambda b, t: (b, 0)),            # h0
                pl.BlockSpec((h_pad, h_pad), lambda b, t: (0, 0)),              # W_masked.T (resident)
            ],
            out_specs=pl.BlockSpec((t_blk, b_shard, h_pad), lambda b, t: (t, b, 0)),
            scratch_shapes=[pltpu.VMEM((b_shard, h_pad), jnp.float32)],         # h carry
        ),
        compiler_params=pltpu.CompilerParams(
            dimension_semantics=("parallel", "arbitrary"),
        ),
    )(xp, h0_p, wm_t_pad)
    return hs_pad[:t_len, :, :hid]


# ----------------------------- module ---------------------------------------


class ClockworkRNNLayerPallas:
    """Pallas TPU implementation of the PyTorch ClockworkRNNLayer forward."""

    def __init__(self, input_size, hidden_size, key):
        self.input_size = int(input_size)
        self.hidden_size = int(hidden_size)
        k_w, k_u = jax.random.split(key)
        self.W = jax.random.normal(k_w, (hidden_size, hidden_size), jnp.float32)
        self.U = jax.random.normal(k_u, (hidden_size, input_size), jnp.float32)
        self._h_pad = _round_up(self.hidden_size, 128)
        # clock_val -> (wm_t, u_t, wm_t_pad, u_t_pad).  NOTE: stale if W/U change.
        self._cache = {}

    def _weights(self, clock_val):
        clock_val = int(clock_val)  # static Python int, as in the reference
        entry = self._cache.get(clock_val)
        if entry is None:
            hid, inp, h_pad = self.hidden_size, self.input_size, self._h_pad
            mask = jnp.asarray(
                [1.0 if (i % 2 == 0 or i % clock_val == 0) else 0.0
                 for i in range(hid)],
                jnp.float32,
            )
            wm_t = (self.W * mask).T                     # (H, H), exact reference math
            u_t = self.U.T                               # (I, H)
            wm_t_pad = jnp.zeros((h_pad, h_pad), jnp.float32).at[:hid, :hid].set(wm_t)
            u_t_pad = jnp.zeros((inp, h_pad), jnp.float32).at[:, :hid].set(u_t)
            entry = (wm_t, u_t, wm_t_pad, u_t_pad)
            self._cache[clock_val] = entry
        return entry

    # Single step — matches PyTorch forward(x, h_prev, timestep, clock_val).
    # For multi-step workloads prefer forward_sequence (one kernel for all T).
    def __call__(self, x, h_prev, timestep, clock_val):
        del timestep  # the reference forward ignores it; kept for signature parity
        wm_t, u_t, _, _ = self._weights(clock_val)
        return _step(x, h_prev, wm_t, u_t)

    # Whole recurrence: input projection + blocked-time recurrence kernels.
    def forward_sequence(self, xs, h0, clock_val, t_blk=None):
        """xs: (T, B, I), h0: (B, H) -> all hidden states (T, B, H)."""
        assert xs.shape[-1] == self.input_size
        _, _, wm_t_pad, u_t_pad = self._weights(clock_val)
        return _forward_sequence(xs, h0, wm_t_pad, u_t_pad, t_blk=t_blk)


# ----------------------------- reference ------------------------------------


def _reference_step(x, h_prev, W, U, clock_val):
    H = W.shape[0]
    mask = jnp.asarray(
        [1.0 if (i % 2 == 0 or i % clock_val == 0) else 0.0 for i in range(H)],
        jnp.float32,
    )
    hi = jnp.dot(h_prev, (W * mask).T, precision=jax.lax.Precision.HIGHEST)
    xi = jnp.dot(x, U.T, precision=jax.lax.Precision.HIGHEST)
    return jnp.tanh(hi + xi)


def _reference_sequence(xs, h0, W, U, clock_val):
    h = h0
    outs = []
    for t in range(xs.shape[0]):
        h = _reference_step(xs[t], h, W, U, clock_val)
        outs.append(h)
    return jnp.stack(outs, axis=0)


if __name__ == "__main__":
    key = jax.random.PRNGKey(0)
    k_param, k_x, k_h, k_seq, k_h2, k_seq2 = jax.random.split(key, 6)

    batch = 8
    input_size = 32
    hidden_size = 32
    clock_val = 3
    timestep = 5

    layer = ClockworkRNNLayerPallas(input_size, hidden_size, k_param)

    # --- single step (PyTorch forward signature) ---
    x = jax.random.normal(k_x, (batch, input_size), jnp.float32)
    h_prev = jax.random.normal(k_h, (batch, hidden_size), jnp.float32)
    h_new = jax.block_until_ready(layer(x, h_prev, timestep, clock_val))
    ref = _reference_step(x, h_prev, layer.W, layer.U, clock_val)
    assert h_new.shape == (batch, hidden_size)
    assert jnp.allclose(h_new, ref, atol=1e-4, rtol=1e-4), float(
        jnp.max(jnp.abs(h_new - ref)))

    # --- sequence, single time block ---
    seq_len = 8
    xs = jax.random.normal(k_seq, (seq_len, batch, input_size), jnp.float32)
    hs = jax.block_until_ready(layer.forward_sequence(xs, h_prev, clock_val))
    refs = _reference_sequence(xs, h_prev, layer.W, layer.U, clock_val)
    assert hs.shape == (seq_len, batch, hidden_size)
    assert jnp.allclose(hs, refs, atol=1e-3, rtol=1e-3), float(
        jnp.max(jnp.abs(hs - refs)))

    # --- sequence, multiple time blocks + time padding + 2 batch shards ---
    batch2, seq_len2 = 16, 20
    xs2 = jax.random.normal(k_seq2, (seq_len2, batch2, input_size), jnp.float32)
    h02 = jax.random.normal(k_h2, (batch2, hidden_size), jnp.float32)
    hs2 = jax.block_until_ready(
        layer.forward_sequence(xs2, h02, clock_val, t_blk=8))
    refs2 = _reference_sequence(xs2, h02, layer.W, layer.U, clock_val)
    assert hs2.shape == (seq_len2, batch2, hidden_size)
    assert jnp.allclose(hs2, refs2, atol=5e-3, rtol=5e-3), float(
        jnp.max(jnp.abs(hs2 - refs2)))

    print("KERNEL_OK")
</pallas_src>

<mosaic_0001>
module attributes {stable_mosaic.version = 11 : i64} {
  func.func @_step_kernel(%arg0: memref<8x32xf32, #tpu.memory_space<vmem>>, %arg1: memref<8x32xf32, #tpu.memory_space<vmem>>, %arg2: memref<32x32xf32, #tpu.memory_space<vmem>>, %arg3: memref<32x32xf32, #tpu.memory_space<vmem>>, %arg4: memref<8x32xf32, #tpu.memory_space<vmem>>) attributes {dimension_semantics = [], scalar_prefetch = 0 : i64, scratch_operands = 0 : i64, tpu.core_type = #tpu.core_type<tc>} {
    %c0 = arith.constant 0 : index
    %c0_0 = arith.constant 0 : index
    %0 = vector.load %arg1[%c0, %c0_0] : memref<8x32xf32, #tpu.memory_space<vmem>>, vector<8x32xf32>
    %c0_1 = arith.constant 0 : index
    %c0_2 = arith.constant 0 : index
    %1 = vector.load %arg2[%c0_1, %c0_2] : memref<32x32xf32, #tpu.memory_space<vmem>>, vector<32x32xf32>
    %cst = arith.constant dense<0.000000e+00> : vector<8x32xf32>
    %2 = tpu.matmul %0, %1, %cst {dimension_numbers = #tpu.dot_dimension_numbers<[1], [0], [0], [1], [0, 0, 1, 1], [], []>} : vector<8x32xf32>, vector<32x32xf32>, vector<8x32xf32> -> vector<8x32xf32>
    %c0_3 = arith.constant 0 : index
    %c0_4 = arith.constant 0 : index
    %3 = vector.load %arg0[%c0_3, %c0_4] : memref<8x32xf32, #tpu.memory_space<vmem>>, vector<8x32xf32>
    %c0_5 = arith.constant 0 : index
    %c0_6 = arith.constant 0 : index
    %4 = vector.load %arg3[%c0_5, %c0_6] : memref<32x32xf32, #tpu.memory_space<vmem>>, vector<32x32xf32>
    %cst_7 = arith.constant dense<0.000000e+00> : vector<8x32xf32>
    %5 = tpu.matmul %3, %4, %cst_7 {dimension_numbers = #tpu.dot_dimension_numbers<[1], [0], [0], [1], [0, 0, 1, 1], [], []>} : vector<8x32xf32>, vector<32x32xf32>, vector<8x32xf32> -> vector<8x32xf32>
    %6 = arith.addf %2, %5 : vector<8x32xf32>
    %7 = math.tanh %6 : vector<8x32xf32>
    %c0_8 = arith.constant 0 : index
    %c0_9 = arith.constant 0 : index
    %8 = vector.load %arg4[%c0_8, %c0_9] : memref<8x32xf32, #tpu.memory_space<vmem>>, vector<8x32xf32>
    tpu.vector_store %arg4[%c0_8, %c0_9], %7 {strides = array<i32>} : memref<8x32xf32, #tpu.memory_space<vmem>>, vector<8x32xf32>,
    return
  }
}

</mosaic_0001>

<llo_original>
// kernel: _step.1
$region0: #{_step.1}
  #allocation0 [shape = 'u32[]', space=smem, size = 0x4, offset = 0x4, fixed_abs, tag = 'smem constant byte address 0x4 - core index']
  #allocation1 [shape = 'u32[144,128]{1,0:T(1,128)}', space=vmem, size = 0x12000, scoped, tag = 'internal scratch']
  %s0 = inlined_call_operand.hbm [shape: f32[8,32], index: 0, kind: input, shape index: {}]
  %s1 = inlined_call_operand.hbm [shape: f32[8,32], index: 1, kind: input, shape index: {}]
  %s2 = inlined_call_operand.hbm [shape: f32[32,32], index: 2, kind: input, shape index: {}]
  %s3 = inlined_call_operand.hbm [shape: f32[32,32], index: 3, kind: input, shape index: {}]
  %s4 = inlined_call_operand.hbm [shape: f32[8,32], index: 4, kind: output, shape index: {}]
  %s5 = sld [smem:[#allocation0]]
  $region42: #{_step.1} parent=0
    _
  %s7 = ssub.s32 1, %s5
  %s8 = scalar_select 0, %s7, %s5
  $region1: #{_step.1} parent=0
    #allocation2 [shape = 'u8[4096]{0}', space=vmem, size = 0x1000, scoped, tag = 'input window, operand 0, single buffered']
    #allocation3 [shape = 's32[1]{0}', space=sflag, size = 0x4, scoped, tag = 'scoped memory for _step.1']
    #allocation4 [shape = 's32[1]{0}', space=sflag, size = 0x4, scoped, tag = 'scoped memory for _step.1']
    #allocation5 [shape = 'u8[4096]{0}', space=vmem, size = 0x1000, scoped, tag = 'input window, operand 1, single buffered']
    #allocation6 [shape = 's32[1]{0}', space=sflag, size = 0x4, scoped, tag = 'scoped memory for _step.1']
    #allocation7 [shape = 'u8[16384]{0}', space=vmem, size = 0x4000, scoped, tag = 'input window, operand 2, single buffered']
    #allocation8 [shape = 'u8[16384]{0}', space=vmem, size = 0x4000, scoped, tag = 'input window, operand 3, single buffered']
    #allocation9 [shape = 's32[1]{0}', space=sflag, size = 0x4, scoped, tag = 'scoped memory for _step.1']
    #allocation10 [shape = 'u8[4096]{0}', space=vmem, size = 0x1000, scoped, tag = 'output window, operand 0, single buffered']
    %9 = vsyncpa [#allocation3], 0
    %10 = vsyncpa [#allocation6], 0
    %11 = vsyncpa [#allocation9], 0
    %12 = vsyncpa [#allocation4], 0
    // Predicated region
    $region2: #{_step.1} parent=1 // pred_check
      _
    $region3: #{_step.1} parent=1 // pred_check_branch
      %14 = sbr.rel (0) target = $region5
    $region4: #{_step.1} parent=1 // pred_region
      %s16 = ssub.s32 128, 128
      %17 = vsyncadd [#allocation3], %s16
      %s19 = sshll.u32 [#allocation2], 4
      %s20 = int_to_ptr.vmem [resolvable:$true] %s19
      %22 = dma.hbm_to_vmem [thread:$0]  %s0, 128, %s20, [#allocation3]
    $region5: #{_step.1} parent=1 // pred_fallthru
      _
    // Predicated region
    $region6: #{_step.1} parent=1 // pred_check
      _
    $region7: #{_step.1} parent=1 // pred_check_branch
      %24 = sbr.rel (0) target = $region9
    $region8: #{_step.1} parent=1 // pred_region
      %s26 = ssub.s32 128, 128
      %27 = vsyncadd [#allocation6], %s26
      %s29 = sshll.u32 [#allocation5], 4
      %s30 = int_to_ptr.vmem [resolvable:$true] %s29
      %32 = dma.hbm_to_vmem [thread:$0]  %s1, 128, %s30, [#allocation6]
    $region9: #{_step.1} parent=1 // pred_fallthru
      _
    // Predicated region
    $region10: #{_step.1} parent=1 // pred_check
      _
    $region11: #{_step.1} parent=1 // pred_check_branch
      %34 = sbr.rel (0) target = $region13
    $region12: #{_step.1} parent=1 // pred_region
      %s36 = ssub.s32 512, 512
      %37 = vsyncadd [#allocation6], %s36
      %s38 = sshll.u32 [#allocation7], 4
      %s39 = int_to_ptr.vmem [resolvable:$true] %s38
      %44 = dma.hbm_to_vmem [thread:$0]  %s2, 512, %s39, [#allocation6], 128, 128, 8
    $region13: #{_step.1} parent=1 // pred_fallthru
      _
    // Predicated region
    $region14: #{_step.1} parent=1 // pred_check
      _
    $region15: #{_step.1} parent=1 // pred_check_branch
      %46 = sbr.rel (0) target = $region17
    $region16: #{_step.1} parent=1 // pred_region
      %s48 = ssub.s32 512, 512
      %49 = vsyncadd [#allocation9], %s48
      %s50 = sshll.u32 [#allocation8], 4
      %s51 = int_to_ptr.vmem [resolvable:$true] %s50
      %56 = dma.hbm_to_vmem [thread:$0]  %s3, 512, %s51, [#allocation9], 128, 128, 8
    $region17: #{_step.1} parent=1 // pred_fallthru
      _
    // Predicated region
    $region18: #{_step.1} parent=1 // pred_check
      _
    $region19: #{_step.1} parent=1 // pred_check_branch
      %58 = sbr.rel (0) target = $region21
    $region20: #{_step.1} parent=1 // pred_region
      %59 = dma.done [#allocation3], 128
    $region21: #{_step.1} parent=1 // pred_fallthru
      _
    // Predicated region
    $region22: #{_step.1} parent=1 // pred_check
      _
    $region23: #{_step.1} parent=1 // pred_check_branch
      %61 = sbr.rel (0) target = $region25
    $region24: #{_step.1} parent=1 // pred_region
      %62 = dma.done [#allocation6], 128
    $region25: #{_step.1} parent=1 // pred_fallthru
      _
    // Predicated region
    $region26: #{_step.1} parent=1 // pred_check
      _
    $region27: #{_step.1} parent=1 // pred_check_branch
      %64 = sbr.rel (0) target = $region29
    $region28: #{_step.1} parent=1 // pred_region
      %65 = dma.done [#allocation6], 512
    $region29: #{_step.1} parent=1 // pred_fallthru
      _
    // Predicated region
    $region30: #{_step.1} parent=1 // pred_check
      _
    $region31: #{_step.1} parent=1 // pred_check_branch
      %67 = sbr.rel (0) target = $region33
    $region32: #{_step.1} parent=1 // pred_region
      %68 = dma.done [#allocation9], 512
    $region33: #{_step.1} parent=1 // pred_fallthru
      _
    %v69 = vld [vmem:[#allocation5] sm:$0xff]
    %v70 = vld [vmem:[#allocation7] sm:$0xff]
    %v71 = vld [vmem:[#allocation7 + $0x8] sm:$0xff]
    %v72 = vld [vmem:[#allocation7 + $0x10] sm:$0xff]
    %v73 = vld [vmem:[#allocation7 + $0x18] sm:$0xff]
    %v74 = vld [vmem:[#allocation2] sm:$0xff]
    %v75 = vld [vmem:[#allocation8] sm:$0xff]
    %v76 = vld [vmem:[#allocation8 + $0x8] sm:$0xff]
    %v77 = vld [vmem:[#allocation8 + $0x10] sm:$0xff]
    %v78 = vld [vmem:[#allocation8 + $0x18] sm:$0xff]
    %vm79 = vcmask 261120
    %v81 = vsel %vm79, %v74, 0
    %83 = vmatprep.subr.mxu0 0.0
    %84 = vmatpush1.msra.mxu0 %v75
    %85 = vmatprep.subr.mxu0 0.0
    %86 = vmatpush1.msra.mxu0 %v76
    %87 = vmatprep.subr.mxu0 0.0
    %88 = vmatpush1.msra.mxu0 %v77
    %89 = vmatprep.subr.mxu0 0.0
    %90 = vmatpush1.msra.mxu0 %v78
    %91 = vmatprep.subr.mxu0 0.0
    %92 = vmatpush1.msra.mxu0 0.0
    %93 = vmatprep.subr.mxu0 0.0
    %94 = vmatpush1.msra.mxu0 0.0
    %95 = vmatprep.subr.mxu0 0.0
    %96 = vmatpush1.msra.mxu0 0.0
    %97 = vmatprep.subr.mxu0 0.0
    %98 = vmatpush1.msra.mxu0 0.0
    %99 = vmatprep.subr.mxu0 0.0
    %100 = vmatpush1.msra.mxu0 0.0
    %101 = vmatprep.subr.mxu0 0.0
    %102 = vmatpush1.msra.mxu0 0.0
    %103 = vmatprep.subr.mxu0 0.0
    %104 = vmatpush1.msra.mxu0 0.0
    %105 = vmatprep.subr.mxu0 0.0
    %106 = vmatpush1.msra.mxu0 0.0
    %107 = vmatprep.subr.mxu0 0.0
    %108 = vmatpush1.msra.mxu0 0.0
    %109 = vmatprep.subr.mxu0 0.0
    %110 = vmatpush1.msra.mxu0 0.0
    %111 = vmatprep.subr.mxu0 0.0
    %112 = vmatpush1.msra.mxu0 0.0
    %113 = vmatprep.subr.mxu0 0.0
    %114 = vmatpush1.msra.mxu0 0.0
    %115 = vmatprep.subr.mxu0 0.0
    %116 = vmatpush1.msra.mxu0 0.0
    %117 = vmatprep.subr.mxu0 0.0
    %118 = vmatpush1.msra.mxu0 0.0
    %119 = vmatprep.subr.mxu0 0.0
    %120 = vmatpush1.msra.mxu0 0.0
    %121 = vmatprep.subr.mxu0 0.0
    %122 = vmatpush1.msra.mxu0 0.0
    %123 = vmatprep.subr.mxu0 0.0
    %124 = vmatpush1.msra.mxu0 0.0
    %125 = vmatprep.subr.mxu0 0.0
    %126 = vmatpush1.msra.mxu0 0.0
    %127 = vmatprep.subr.mxu0 0.0
    %128 = vmatpush1.msra.mxu0 0.0
    %129 = vmatprep.subr.mxu0 0.0
    %130 = vmatpush1.msra.mxu0 0.0
    %131 = vmatprep.subr.mxu0 0.0
    %132 = vmatpush1.msra.mxu0 0.0
    %133 = vmatprep.subr.mxu0 0.0
    %134 = vmatpush1.msra.mxu0 0.0
    %135 = vmatprep.subr.mxu0 0.0
    %136 = vmatpush1.msra.mxu0 0.0
    %137 = vmatprep.subr.mxu0 0.0
    %138 = vmatpush1.msra.mxu0 0.0
    %139 = vmatprep.subr.mxu0 0.0
    %140 = vmatpush1.msra.mxu0 0.0
    %141 = vmatprep.subr.mxu0 0.0
    %142 = vmatpush1.msra.mxu0 0.0
    %143 = vmatprep.subr.mxu0 0.0
    %144 = vmatpush1.msra.mxu0 0.0
    %145 = vmatprep.subr.mxu0 0.0
    %146 = vmatpush1.msra.mxu0 0.0
    %147 = vmatprep.mubr.f32.mxu0 0.0
    %148 = vmatmul.mubr.f32.gmra.mrb[0].mxu0 %v81
    %v149 = vpop.f32.mrb[0].mxu0
    %v150 = vadd.f32 0.0, %v149
    %v151 = vpop.f32.mrb[0].mxu0
    %152 = vdwg.mxu0
    %v154 = vsel %vm79, %v69, 0
    %156 = vmatprep.subr.mxu0 0.0
    %157 = vmatpush1.msra.mxu0 %v70
    %158 = vmatprep.subr.mxu0 0.0
    %159 = vmatpush1.msra.mxu0 %v71
    %160 = vmatprep.subr.mxu0 0.0
    %161 = vmatpush1.msra.mxu0 %v72
    %162 = vmatprep.subr.mxu0 0.0
    %163 = vmatpush1.msra.mxu0 %v73
    %164 = vmatprep.subr.mxu0 0.0
    %165 = vmatpush1.msra.mxu0 0.0
    %166 = vmatprep.subr.mxu0 0.0
    %167 = vmatpush1.msra.mxu0 0.0
    %168 = vmatprep.subr.mxu0 0.0
    %169 = vmatpush1.msra.mxu0 0.0
    %170 = vmatprep.subr.mxu0 0.0
    %171 = vmatpush1.msra.mxu0 0.0
    %172 = vmatprep.subr.mxu0 0.0
    %173 = vmatpush1.msra.mxu0 0.0
    %174 = vmatprep.subr.mxu0 0.0
    %175 = vmatpush1.msra.mxu0 0.0
    %176 = vmatprep.subr.mxu0 0.0
    %177 = vmatpush1.msra.mxu0 0.0
    %178 = vmatprep.subr.mxu0 0.0
    %179 = vmatpush1.msra.mxu0 0.0
    %180 = vmatprep.subr.mxu0 0.0
    %181 = vmatpush1.msra.mxu0 0.0
    %182 = vmatprep.subr.mxu0 0.0
    %183 = vmatpush1.msra.mxu0 0.0
    %184 = vmatprep.subr.mxu0 0.0
    %185 = vmatpush1.msra.mxu0 0.0
    %186 = vmatprep.subr.mxu0 0.0
    %187 = vmatpush1.msra.mxu0 0.0
    %188 = vmatprep.subr.mxu0 0.0
    %189 = vmatpush1.msra.mxu0 0.0
    %190 = vmatprep.subr.mxu0 0.0
    %191 = vmatpush1.msra.mxu0 0.0
    %192 = vmatprep.subr.mxu0 0.0
    %193 = vmatpush1.msra.mxu0 0.0
    %194 = vmatprep.subr.mxu0 0.0
    %195 = vmatpush1.msra.mxu0 0.0
    %196 = vmatprep.subr.mxu0 0.0
    %197 = vmatpush1.msra.mxu0 0.0
    %198 = vmatprep.subr.mxu0 0.0
    %199 = vmatpush1.msra.mxu0 0.0
    %200 = vmatprep.subr.mxu0 0.0
    %201 = vmatpush1.msra.mxu0 0.0
    %202 = vmatprep.subr.mxu0 0.0
    %203 = vmatpush1.msra.mxu0 0.0
    %204 = vmatprep.subr.mxu0 0.0
    %205 = vmatpush1.msra.mxu0 0.0
    %206 = vmatprep.subr.mxu0 0.0
    %207 = vmatpush1.msra.mxu0 0.0
    %208 = vmatprep.subr.mxu0 0.0
    %209 = vmatpush1.msra.mxu0 0.0
    %210 = vmatprep.subr.mxu0 0.0
    %211 = vmatpush1.msra.mxu0 0.0
    %212 = vmatprep.subr.mxu0 0.0
    %213 = vmatpush1.msra.mxu0 0.0
    %214 = vmatprep.subr.mxu0 0.0
    %215 = vmatpush1.msra.mxu0 0.0
    %216 = vmatprep.subr.mxu0 0.0
    %217 = vmatpush1.msra.mxu0 0.0
    %218 = vmatprep.subr.mxu0 0.0
    %219 = vmatpush1.msra.mxu0 0.0
    %220 = vmatprep.mubr.f32.mxu0 0.0
    %221 = vmatmul.mubr.f32.gmra.mrb[0].mxu0 %v154
    %v222 = vpop.f32.mrb[0].mxu0
    %v223 = vadd.f32 %v150, %v222
    %v224 = vpop.f32.mrb[0].mxu0
    %225 = vdwg.mxu0
    %v226 = vtanh.pop %v223
    %227 = vst.msk [vmem:[#allocation10] sm:$0xff] %vm79, %v226
    // Predicated region
    $region34: #{_step.1} parent=1 // pred_check
      _
    $region35: #{_step.1} parent=1 // pred_check_branch
      %229 = sbr.rel (0) target = $region37
    $region36: #{_step.1} parent=1 // pred_region
      %s231 = ssub.s32 128, 128
      %232 = vsyncadd [#allocation4], %s231
      %s234 = sshll.u32 [#allocation10], 4
      %s235 = int_to_ptr.vmem [resolvable:$true] %s234
      %237 = dma.vmem_to_hbm [thread:$0]  %s235, 128, %s4, [#allocation4]
    $region37: #{_step.1} parent=1 // pred_fallthru
      _
    // Predicated region
    $region38: #{_step.1} parent=1 // pred_check
      _
    $region39: #{_step.1} parent=1 // pred_check_branch
      %239 = sbr.rel (0) target = $region41
    $region40: #{_step.1} parent=1 // pred_region
      %240 = dma.done [#allocation4], 128
    $region41: #{_step.1} parent=1 // pred_fallthru
      _
    %241 = vsyncpa [#allocation3], 1
    %242 = vsyncpa [#allocation6], 1
    %243 = vsyncpa [#allocation9], 1
    %244 = vsyncpa [#allocation4], 1

</llo_original>
